<compile_context>
chip_gen: v5e
topology: v5e:2x2
jax: 0.10.0
libtpu: 0.0.40
codegen_flags: <defaults>
</compile_context>

<pallas_src>
import functools

import jax
import jax.numpy as jnp
from jax import lax
from jax.experimental import pallas as pl
from jax.experimental.pallas import tpu as pltpu

KERNEL_SIZE = 3
NEG_SLOPE = 0.6
SCALE_RATIO = 0.2


def _leaky_relu(x, negative_slope):
    return jnp.where(x > 0, x, negative_slope * x)


def resnet_block_kernel(x_ref, w1_ref, b1_ref, w2_ref, b2_ref, out_ref, taps_ref, *,
                        W, negative_slope, post_scale):
    # x_ref   : (b_tile, C, HW)   channels in sublanes, flat spatial in lanes
    # w*_ref  : (C_out, 9*C_in)   taps stacked along K, tap order (dy, dx, cin)
    # b*_ref  : (C_out, 1)
    # out_ref : (b_tile, C, HW)
    # taps_ref: (9*C, HW) VMEM scratch, reused for both convs and every batch element
    b_tile, C, HW = x_ref.shape

    # Grid-invariant boundary masks from a (1, HW) lane iota (broadcast at the where).
    lane = lax.broadcasted_iota(jnp.int32, (1, HW), 1)
    w_pos = (lane & (W - 1)) if (W & (W - 1)) == 0 else (lane % W)
    ok_w = {-1: w_pos >= 1, 0: None, 1: w_pos <= (W - 2)}   # w + ox stays in [0, W)
    ok_h = {-1: lane >= W, 0: None, 1: lane < (HW - W)}     # h + oy stays in [0, H)

    def write_taps(a):
        # a: (C, HW).  tap[(dy,dx)][:, p] = a[:, p + oy*W + ox] with SAME zero padding,
        # written into taps_ref rows [k*C, (k+1)*C), k = dy*3 + dx (row-major).
        # Cyclic roll wrap-arounds only land in lanes the combined mask zeroes.
        k = 0
        for oy in (-1, 0, 1):
            base = pltpu.roll(a, (-oy * W) % HW, axis=1) if oy != 0 else a
            for ox in (-1, 0, 1):
                tap = pltpu.roll(base, (-ox) % HW, axis=1) if ox != 0 else base
                mh, mw = ok_h[oy], ok_w[ox]
                mask = mh if mw is None else (mw if mh is None else (mh & mw))
                if mask is not None:
                    tap = jnp.where(mask, tap, 0.0)
                taps_ref[pl.ds(k * C, C), :] = tap
                k += 1

    for b in range(b_tile):  # small compile-time constant -> fully unrolled
        x2d = x_ref[b]  # (C, HW)

        # ---- conv1 + bias + leaky: one (C, 9C) x (9C, HW) MXU matmul ----
        write_taps(x2d)
        h1 = jnp.dot(w1_ref[...], taps_ref[...], preferred_element_type=jnp.float32)
        h1 = _leaky_relu(h1 + b1_ref[...], negative_slope)

        # ---- conv2 + bias + leaky (scale_ratio pre-folded into w2/b2 when > 0) ----
        write_taps(h1)
        h2 = jnp.dot(w2_ref[...], taps_ref[...], preferred_element_type=jnp.float32)
        h2 = _leaky_relu(h2 + b2_ref[...], negative_slope)

        if post_scale != 1.0:  # only taken when scale_ratio <= 0 could not be folded
            h2 = h2 * post_scale

        # ---- residual add (lane-dense store) ----
        out_ref[b] = (h2 + x2d).astype(out_ref.dtype)


def _pick_b_tile(n):
    # Amortize per-grid-step overhead on single-TC v5e/v6e while keeping >= 2 grid
    # blocks so both v7x TensorCores stay busy.
    if n <= 2:
        return 1
    for bt in range(max(1, n // 2), 0, -1):
        if n % bt == 0:
            return bt
    return 1


def resnet_block(x_nchw, w1, b1, w2, b2,
                 *, negative_slope=NEG_SLOPE, scale_ratio=SCALE_RATIO):
    """x_nchw: (N, C, H, W) f32; w*: HWIO (3,3,Cin,Cout); b*: (Cout,).  Returns (N, C, H, W)."""
    N, C, H, W = x_nchw.shape
    c_out = w1.shape[3]
    assert c_out == C, "residual add requires in_channels == out_channels"
    HW = H * W
    K9C = KERNEL_SIZE * KERNEL_SIZE * C

    # Free reshapes only -- no transpose / pad of the activation.
    x2 = x_nchw.reshape(N, C, HW).astype(jnp.float32)
    # HWIO (3,3,Cin,Cout) -> (Cout, 9*Cin), K-order (dy, dx, cin) matching write_taps.
    w1_t = jnp.transpose(w1, (3, 0, 1, 2)).reshape(c_out, K9C).astype(jnp.float32)
    w2_t = jnp.transpose(w2, (3, 0, 1, 2)).reshape(c_out, K9C).astype(jnp.float32)
    b1_2 = b1.reshape(c_out, 1).astype(jnp.float32)
    b2_2 = b2.reshape(c_out, 1).astype(jnp.float32)

    # Fold scale_ratio into conv2 weights/bias (valid: leaky ReLU positively homogeneous).
    if scale_ratio > 0:
        w2_t = w2_t * scale_ratio
        b2_2 = b2_2 * scale_ratio
        post_scale = 1.0
    else:
        post_scale = float(scale_ratio)

    b_tile = _pick_b_tile(N)
    grid_n = N // b_tile

    kernel = functools.partial(resnet_block_kernel, W=W,
                               negative_slope=negative_slope,
                               post_scale=post_scale)

    # VMEM budget from the actual footprint (double-buffered blocks + resident weights +
    # tap scratch) with headroom for in-kernel temporaries; clamped below v7x's 64 MiB.
    blk_bytes = 4 * b_tile * C * HW
    w_bytes = 4 * 2 * (c_out * K9C + c_out)
    scratch_bytes = 4 * KERNEL_SIZE * KERNEL_SIZE * C * HW
    vmem_limit_bytes = int(min(48 * 1024 * 1024,
                               max(16 * 1024 * 1024,
                                   4 * (4 * blk_bytes + 2 * w_bytes + scratch_bytes))))

    out = pl.pallas_call(
        kernel,
        out_shape=jax.ShapeDtypeStruct((N, C, HW), jnp.float32),
        grid_spec=pltpu.PrefetchScalarGridSpec(
            num_scalar_prefetch=0,
            grid=(grid_n,),
            in_specs=[
                pl.BlockSpec((b_tile, C, HW), lambda n: (n, 0, 0)),
                pl.BlockSpec((c_out, K9C), lambda n: (0, 0)),
                pl.BlockSpec((c_out, 1), lambda n: (0, 0)),
                pl.BlockSpec((c_out, K9C), lambda n: (0, 0)),
                pl.BlockSpec((c_out, 1), lambda n: (0, 0)),
            ],
            out_specs=pl.BlockSpec((b_tile, C, HW), lambda n: (n, 0, 0)),
            scratch_shapes=[
                pltpu.VMEM((KERNEL_SIZE * KERNEL_SIZE * C, HW), jnp.float32)],
        ),
        compiler_params=pltpu.CompilerParams(
            dimension_semantics=("parallel",),   # batch blocks independent -> both v7x TCs
            vmem_limit_bytes=vmem_limit_bytes),
    )(x2, w1_t, b1_2, w2_t, b2_2)

    return out.reshape(N, C, H, W)


def resnet_block_reference(x_nchw, w1, b1, w2, b2,
                           *, negative_slope=NEG_SLOPE, scale_ratio=SCALE_RATIO):
    """Pure-JAX reference (NHWC conv via lax.conv_general_dilated)."""
    x = jnp.transpose(x_nchw, (0, 2, 3, 1)).astype(jnp.float32)
    dn = lax.conv_dimension_numbers(x.shape, w1.shape, ('NHWC', 'HWIO', 'NHWC'))
    c1 = lax.conv_general_dilated(x, w1, (1, 1), 'SAME', dimension_numbers=dn) + b1
    c1 = _leaky_relu(c1, negative_slope)
    c2 = lax.conv_general_dilated(c1, w2, (1, 1), 'SAME', dimension_numbers=dn) + b2
    c2 = _leaky_relu(c2, negative_slope)
    out = c2 * scale_ratio + x
    return jnp.transpose(out, (0, 3, 1, 2))


if __name__ == "__main__":
    # Small, residual-compatible shapes: N=2, C_in=C_out=8, H=W=16  (H*W = 256 lanes)
    N, C, H, W = 2, 8, 16, 16

    key = jax.random.PRNGKey(0)
    kx, kw1, kb1, kw2, kb2 = jax.random.split(key, 5)

    x = jax.random.normal(kx, (N, C, H, W), dtype=jnp.float32)

    fan_in = C * KERNEL_SIZE * KERNEL_SIZE
    scale = 1.0 / jnp.sqrt(jnp.float32(fan_in))
    w1 = jax.random.normal(kw1, (KERNEL_SIZE, KERNEL_SIZE, C, C), jnp.float32) * scale
    b1 = jax.random.normal(kb1, (C,), jnp.float32) * scale
    w2 = jax.random.normal(kw2, (KERNEL_SIZE, KERNEL_SIZE, C, C), jnp.float32) * scale
    b2 = jax.random.normal(kb2, (C,), jnp.float32) * scale

    out = resnet_block(x, w1, b1, w2, b2)
    out = jax.block_until_ready(out)

    ref = jax.block_until_ready(resnet_block_reference(x, w1, b1, w2, b2))
    assert out.shape == (N, C, H, W)
    assert jnp.allclose(out, ref, atol=1e-3, rtol=1e-3), \
        f"max abs err {jnp.max(jnp.abs(out - ref))}"

    print("KERNEL_OK")
</pallas_src>

<mosaic_0001>
module attributes {stable_mosaic.version = 11 : i64} {
  func.func @resnet_block_kernel(%arg0: i32, %arg1: memref<1x8x256xf32, #tpu.memory_space<vmem>>, %arg2: memref<8x72xf32, #tpu.memory_space<vmem>>, %arg3: memref<8x1xf32, #tpu.memory_space<vmem>>, %arg4: memref<8x72xf32, #tpu.memory_space<vmem>>, %arg5: memref<8x1xf32, #tpu.memory_space<vmem>>, %arg6: memref<1x8x256xf32, #tpu.memory_space<vmem>>, %arg7: memref<72x256xf32, #tpu.memory_space<vmem>>) attributes {dimension_semantics = [#tpu.dimension_semantics<parallel>], iteration_bounds = array<i64: 2>, scalar_prefetch = 0 : i64, scratch_operands = 1 : i64, tpu.core_type = #tpu.core_type<tc>, window_params = [{transform_indices = @transform_0, window_bounds = array<i64: 1, 8, 256>}, {pipeline_mode = #tpu.pipeline_mode<synchronous>, transform_indices = @transform_1, window_bounds = array<i64: 8, 72>}, {pipeline_mode = #tpu.pipeline_mode<synchronous>, transform_indices = @transform_2, window_bounds = array<i64: 8, 1>}, {pipeline_mode = #tpu.pipeline_mode<synchronous>, transform_indices = @transform_3, window_bounds = array<i64: 8, 72>}, {pipeline_mode = #tpu.pipeline_mode<synchronous>, transform_indices = @transform_4, window_bounds = array<i64: 8, 1>}, {transform_indices = @transform_5, window_bounds = array<i64: 1, 8, 256>}]} {
    %0 = tpu.iota {dimensions = array<i32: 1>} : vector<1x256xi32>
    %c15_i32 = arith.constant 15 : i32
    %1 = vector.broadcast %c15_i32 : i32 to vector<1x256xi32>
    %2 = arith.andi %0, %1 : vector<1x256xi32>
    %c1_i32 = arith.constant 1 : i32
    %3 = vector.broadcast %c1_i32 : i32 to vector<1x256xi32>
    %4 = arith.cmpi sge, %2, %3 : vector<1x256xi32>
    %c14_i32 = arith.constant 14 : i32
    %5 = vector.broadcast %c14_i32 : i32 to vector<1x256xi32>
    %6 = arith.cmpi sle, %2, %5 : vector<1x256xi32>
    %c16_i32 = arith.constant 16 : i32
    %7 = vector.broadcast %c16_i32 : i32 to vector<1x256xi32>
    %8 = arith.cmpi sge, %0, %7 : vector<1x256xi32>
    %c240_i32 = arith.constant 240 : i32
    %9 = vector.broadcast %c240_i32 : i32 to vector<1x256xi32>
    %10 = arith.cmpi slt, %0, %9 : vector<1x256xi32>
    %c0 = arith.constant 0 : index
    %c0_0 = arith.constant 0 : index
    %c0_1 = arith.constant 0 : index
    %11 = vector.load %arg1[%c0, %c0_0, %c0_1] : memref<1x8x256xf32, #tpu.memory_space<vmem>>, vector<1x8x256xf32>
    %12 = vector.shape_cast %11 : vector<1x8x256xf32> to vector<8x256xf32>
    %c16_i32_2 = arith.constant 16 : i32
    %13 = tpu.dynamic_rotate %12 by %c16_i32_2 dim 1 : vector<8x256xf32>, i32 -> vector<8x256xf32>
    %c1_i32_3 = arith.constant 1 : i32
    %14 = tpu.dynamic_rotate %13 by %c1_i32_3 dim 1 : vector<8x256xf32>, i32 -> vector<8x256xf32>
    %15 = arith.andi %8, %4 : vector<1x256xi1>
    %cst = arith.constant 0.000000e+00 : f32
    %16 = vector.shape_cast %15 : vector<1x256xi1> to vector<1x256xi1>
    %17 = vector.broadcast %16 : vector<1x256xi1> to vector<8x256xi1>
    %18 = vector.broadcast %cst : f32 to vector<8x256xf32>
    %19 = arith.select %17, %14, %18 : vector<8x256xi1>, vector<8x256xf32>
    %c0_4 = arith.constant 0 : index
    %c0_5 = arith.constant 0 : index
    %20 = vector.load %arg7[%c0_4, %c0_5] : memref<72x256xf32, #tpu.memory_space<vmem>>, vector<8x256xf32>
    tpu.vector_store %arg7[%c0_4, %c0_5], %19 {strides = array<i32>} : memref<72x256xf32, #tpu.memory_space<vmem>>, vector<8x256xf32>,
    %cst_6 = arith.constant 0.000000e+00 : f32
    %21 = vector.shape_cast %8 : vector<1x256xi1> to vector<1x256xi1>
    %22 = vector.broadcast %21 : vector<1x256xi1> to vector<8x256xi1>
    %23 = vector.broadcast %cst_6 : f32 to vector<8x256xf32>
    %24 = arith.select %22, %13, %23 : vector<8x256xi1>, vector<8x256xf32>
    %c8 = arith.constant 8 : index
    %c0_7 = arith.constant 0 : index
    %25 = vector.load %arg7[%c8, %c0_7] : memref<72x256xf32, #tpu.memory_space<vmem>>, vector<8x256xf32>
    tpu.vector_store %arg7[%c8, %c0_7], %24 {strides = array<i32>} : memref<72x256xf32, #tpu.memory_space<vmem>>, vector<8x256xf32>,
    %c255_i32 = arith.constant 255 : i32
    %26 = tpu.dynamic_rotate %13 by %c255_i32 dim 1 : vector<8x256xf32>, i32 -> vector<8x256xf32>
    %27 = arith.andi %8, %6 : vector<1x256xi1>
    %cst_8 = arith.constant 0.000000e+00 : f32
    %28 = vector.shape_cast %27 : vector<1x256xi1> to vector<1x256xi1>
    %29 = vector.broadcast %28 : vector<1x256xi1> to vector<8x256xi1>
    %30 = vector.broadcast %cst_8 : f32 to vector<8x256xf32>
    %31 = arith.select %29, %26, %30 : vector<8x256xi1>, vector<8x256xf32>
    %c16 = arith.constant 16 : index
    %c0_9 = arith.constant 0 : index
    %32 = vector.load %arg7[%c16, %c0_9] : memref<72x256xf32, #tpu.memory_space<vmem>>, vector<8x256xf32>
    tpu.vector_store %arg7[%c16, %c0_9], %31 {strides = array<i32>} : memref<72x256xf32, #tpu.memory_space<vmem>>, vector<8x256xf32>,
    %c1_i32_10 = arith.constant 1 : i32
    %33 = tpu.dynamic_rotate %12 by %c1_i32_10 dim 1 : vector<8x256xf32>, i32 -> vector<8x256xf32>
    %cst_11 = arith.constant 0.000000e+00 : f32
    %34 = vector.shape_cast %4 : vector<1x256xi1> to vector<1x256xi1>
    %35 = vector.broadcast %34 : vector<1x256xi1> to vector<8x256xi1>
    %36 = vector.broadcast %cst_11 : f32 to vector<8x256xf32>
    %37 = arith.select %35, %33, %36 : vector<8x256xi1>, vector<8x256xf32>
    %c24 = arith.constant 24 : index
    %c0_12 = arith.constant 0 : index
    %38 = vector.load %arg7[%c24, %c0_12] : memref<72x256xf32, #tpu.memory_space<vmem>>, vector<8x256xf32>
    tpu.vector_store %arg7[%c24, %c0_12], %37 {strides = array<i32>} : memref<72x256xf32, #tpu.memory_space<vmem>>, vector<8x256xf32>,
    %c32 = arith.constant 32 : index
    %c0_13 = arith.constant 0 : index
    %39 = vector.load %arg7[%c32, %c0_13] : memref<72x256xf32, #tpu.memory_space<vmem>>, vector<8x256xf32>
    tpu.vector_store %arg7[%c32, %c0_13], %12 {strides = array<i32>} : memref<72x256xf32, #tpu.memory_space<vmem>>, vector<8x256xf32>,
    %c255_i32_14 = arith.constant 255 : i32
    %40 = tpu.dynamic_rotate %12 by %c255_i32_14 dim 1 : vector<8x256xf32>, i32 -> vector<8x256xf32>
    %cst_15 = arith.constant 0.000000e+00 : f32
    %41 = vector.shape_cast %6 : vector<1x256xi1> to vector<1x256xi1>
    %42 = vector.broadcast %41 : vector<1x256xi1> to vector<8x256xi1>
    %43 = vector.broadcast %cst_15 : f32 to vector<8x256xf32>
    %44 = arith.select %42, %40, %43 : vector<8x256xi1>, vector<8x256xf32>
    %c40 = arith.constant 40 : index
    %c0_16 = arith.constant 0 : index
    %45 = vector.load %arg7[%c40, %c0_16] : memref<72x256xf32, #tpu.memory_space<vmem>>, vector<8x256xf32>
    tpu.vector_store %arg7[%c40, %c0_16], %44 {strides = array<i32>} : memref<72x256xf32, #tpu.memory_space<vmem>>, vector<8x256xf32>,
    %c240_i32_17 = arith.constant 240 : i32
    %46 = tpu.dynamic_rotate %12 by %c240_i32_17 dim 1 : vector<8x256xf32>, i32 -> vector<8x256xf32>
    %c1_i32_18 = arith.constant 1 : i32
    %47 = tpu.dynamic_rotate %46 by %c1_i32_18 dim 1 : vector<8x256xf32>, i32 -> vector<8x256xf32>
    %48 = arith.andi %10, %4 : vector<1x256xi1>
    %cst_19 = arith.constant 0.000000e+00 : f32
    %49 = vector.shape_cast %48 : vector<1x256xi1> to vector<1x256xi1>
    %50 = vector.broadcast %49 : vector<1x256xi1> to vector<8x256xi1>
    %51 = vector.broadcast %cst_19 : f32 to vector<8x256xf32>
    %52 = arith.select %50, %47, %51 : vector<8x256xi1>, vector<8x256xf32>
    %c48 = arith.constant 48 : index
    %c0_20 = arith.constant 0 : index
    %53 = vector.load %arg7[%c48, %c0_20] : memref<72x256xf32, #tpu.memory_space<vmem>>, vector<8x256xf32>
    tpu.vector_store %arg7[%c48, %c0_20], %52 {strides = array<i32>} : memref<72x256xf32, #tpu.memory_space<vmem>>, vector<8x256xf32>,
    %cst_21 = arith.constant 0.000000e+00 : f32
    %54 = vector.shape_cast %10 : vector<1x256xi1> to vector<1x256xi1>
    %55 = vector.broadcast %54 : vector<1x256xi1> to vector<8x256xi1>
    %56 = vector.broadcast %cst_21 : f32 to vector<8x256xf32>
    %57 = arith.select %55, %46, %56 : vector<8x256xi1>, vector<8x256xf32>
    %c56 = arith.constant 56 : index
    %c0_22 = arith.constant 0 : index
    %58 = vector.load %arg7[%c56, %c0_22] : memref<72x256xf32, #tpu.memory_space<vmem>>, vector<8x256xf32>
    tpu.vector_store %arg7[%c56, %c0_22], %57 {strides = array<i32>} : memref<72x256xf32, #tpu.memory_space<vmem>>, vector<8x256xf32>,
    %c255_i32_23 = arith.constant 255 : i32
    %59 = tpu.dynamic_rotate %46 by %c255_i32_23 dim 1 : vector<8x256xf32>, i32 -> vector<8x256xf32>
    %60 = arith.andi %10, %6 : vector<1x256xi1>
    %cst_24 = arith.constant 0.000000e+00 : f32
    %61 = vector.shape_cast %60 : vector<1x256xi1> to vector<1x256xi1>
    %62 = vector.broadcast %61 : vector<1x256xi1> to vector<8x256xi1>
    %63 = vector.broadcast %cst_24 : f32 to vector<8x256xf32>
    %64 = arith.select %62, %59, %63 : vector<8x256xi1>, vector<8x256xf32>
    %c64 = arith.constant 64 : index
    %c0_25 = arith.constant 0 : index
    %65 = vector.load %arg7[%c64, %c0_25] : memref<72x256xf32, #tpu.memory_space<vmem>>, vector<8x256xf32>
    tpu.vector_store %arg7[%c64, %c0_25], %64 {strides = array<i32>} : memref<72x256xf32, #tpu.memory_space<vmem>>, vector<8x256xf32>,
    %c0_26 = arith.constant 0 : index
    %c0_27 = arith.constant 0 : index
    %66 = vector.load %arg2[%c0_26, %c0_27] : memref<8x72xf32, #tpu.memory_space<vmem>>, vector<8x72xf32>
    %c0_28 = arith.constant 0 : index
    %c0_29 = arith.constant 0 : index
    %67 = vector.load %arg7[%c0_28, %c0_29] : memref<72x256xf32, #tpu.memory_space<vmem>>, vector<72x256xf32>
    %cst_30 = arith.constant dense<0.000000e+00> : vector<8x256xf32>
    %68 = tpu.matmul %66, %67, %cst_30 {dimension_numbers = #tpu.dot_dimension_numbers<[1], [0], [0], [1], [0, 0, 1, 1], [], []>} : vector<8x72xf32>, vector<72x256xf32>, vector<8x256xf32> -> vector<8x256xf32>
    %c0_31 = arith.constant 0 : index
    %c0_32 = arith.constant 0 : index
    %69 = vector.load %arg3[%c0_31, %c0_32] : memref<8x1xf32, #tpu.memory_space<vmem>>, vector<8x1xf32>
    %70 = vector.broadcast %69 : vector<8x1xf32> to vector<8x256xf32>
    %71 = arith.addf %68, %70 : vector<8x256xf32>
    %cst_33 = arith.constant 0.000000e+00 : f32
    %72 = vector.broadcast %cst_33 : f32 to vector<8x256xf32>
    %73 = arith.cmpf ogt, %71, %72 : vector<8x256xf32>
    %cst_34 = arith.constant 6.000000e-01 : f32
    %74 = vector.broadcast %cst_34 : f32 to vector<8x256xf32>
    %75 = arith.mulf %74, %71 : vector<8x256xf32>
    %76 = arith.select %73, %71, %75 : vector<8x256xi1>, vector<8x256xf32>
    %c16_i32_35 = arith.constant 16 : i32
    %77 = tpu.dynamic_rotate %76 by %c16_i32_35 dim 1 : vector<8x256xf32>, i32 -> vector<8x256xf32>
    %c1_i32_36 = arith.constant 1 : i32
    %78 = tpu.dynamic_rotate %77 by %c1_i32_36 dim 1 : vector<8x256xf32>, i32 -> vector<8x256xf32>
    %79 = arith.andi %8, %4 : vector<1x256xi1>
    %cst_37 = arith.constant 0.000000e+00 : f32
    %80 = vector.shape_cast %79 : vector<1x256xi1> to vector<1x256xi1>
    %81 = vector.broadcast %80 : vector<1x256xi1> to vector<8x256xi1>
    %82 = vector.broadcast %cst_37 : f32 to vector<8x256xf32>
    %83 = arith.select %81, %78, %82 : vector<8x256xi1>, vector<8x256xf32>
    %c0_38 = arith.constant 0 : index
    %c0_39 = arith.constant 0 : index
    %84 = vector.load %arg7[%c0_38, %c0_39] : memref<72x256xf32, #tpu.memory_space<vmem>>, vector<8x256xf32>
    tpu.vector_store %arg7[%c0_38, %c0_39], %83 {strides = array<i32>} : memref<72x256xf32, #tpu.memory_space<vmem>>, vector<8x256xf32>,
    %cst_40 = arith.constant 0.000000e+00 : f32
    %85 = vector.shape_cast %8 : vector<1x256xi1> to vector<1x256xi1>
    %86 = vector.broadcast %85 : vector<1x256xi1> to vector<8x256xi1>
    %87 = vector.broadcast %cst_40 : f32 to vector<8x256xf32>
    %88 = arith.select %86, %77, %87 : vector<8x256xi1>, vector<8x256xf32>
    %c8_41 = arith.constant 8 : index
    %c0_42 = arith.constant 0 : index
    %89 = vector.load %arg7[%c8_41, %c0_42] : memref<72x256xf32, #tpu.memory_space<vmem>>, vector<8x256xf32>
    tpu.vector_store %arg7[%c8_41, %c0_42], %88 {strides = array<i32>} : memref<72x256xf32, #tpu.memory_space<vmem>>, vector<8x256xf32>,
    %c255_i32_43 = arith.constant 255 : i32
    %90 = tpu.dynamic_rotate %77 by %c255_i32_43 dim 1 : vector<8x256xf32>, i32 -> vector<8x256xf32>
    %91 = arith.andi %8, %6 : vector<1x256xi1>
    %cst_44 = arith.constant 0.000000e+00 : f32
    %92 = vector.shape_cast %91 : vector<1x256xi1> to vector<1x256xi1>
    %93 = vector.broadcast %92 : vector<1x256xi1> to vector<8x256xi1>
    %94 = vector.broadcast %cst_44 : f32 to vector<8x256xf32>
    %95 = arith.select %93, %90, %94 : vector<8x256xi1>, vector<8x256xf32>
    %c16_45 = arith.constant 16 : index
    %c0_46 = arith.constant 0 : index
    %96 = vector.load %arg7[%c16_45, %c0_46] : memref<72x256xf32, #tpu.memory_space<vmem>>, vector<8x256xf32>
    tpu.vector_store %arg7[%c16_45, %c0_46], %95 {strides = array<i32>} : memref<72x256xf32, #tpu.memory_space<vmem>>, vector<8x256xf32>,
    %c1_i32_47 = arith.constant 1 : i32
    %97 = tpu.dynamic_rotate %76 by %c1_i32_47 dim 1 : vector<8x256xf32>, i32 -> vector<8x256xf32>
    %cst_48 = arith.constant 0.000000e+00 : f32
    %98 = vector.shape_cast %4 : vector<1x256xi1> to vector<1x256xi1>
    %99 = vector.broadcast %98 : vector<1x256xi1> to vector<8x256xi1>
    %100 = vector.broadcast %cst_48 : f32 to vector<8x256xf32>
    %101 = arith.select %99, %97, %100 : vector<8x256xi1>, vector<8x256xf32>
    %c24_49 = arith.constant 24 : index
    %c0_50 = arith.constant 0 : index
    %102 = vector.load %arg7[%c24_49, %c0_50] : memref<72x256xf32, #tpu.memory_space<vmem>>, vector<8x256xf32>
    tpu.vector_store %arg7[%c24_49, %c0_50], %101 {strides = array<i32>} : memref<72x256xf32, #tpu.memory_space<vmem>>, vector<8x256xf32>,
    %c32_51 = arith.constant 32 : index
    %c0_52 = arith.constant 0 : index
    %103 = vector.load %arg7[%c32_51, %c0_52] : memref<72x256xf32, #tpu.memory_space<vmem>>, vector<8x256xf32>
    tpu.vector_store %arg7[%c32_51, %c0_52], %76 {strides = array<i32>} : memref<72x256xf32, #tpu.memory_space<vmem>>, vector<8x256xf32>,
    %c255_i32_53 = arith.constant 255 : i32
    %104 = tpu.dynamic_rotate %76 by %c255_i32_53 dim 1 : vector<8x256xf32>, i32 -> vector<8x256xf32>
    %cst_54 = arith.constant 0.000000e+00 : f32
    %105 = vector.shape_cast %6 : vector<1x256xi1> to vector<1x256xi1>
    %106 = vector.broadcast %105 : vector<1x256xi1> to vector<8x256xi1>
    %107 = vector.broadcast %cst_54 : f32 to vector<8x256xf32>
    %108 = arith.select %106, %104, %107 : vector<8x256xi1>, vector<8x256xf32>
    %c40_55 = arith.constant 40 : index
    %c0_56 = arith.constant 0 : index
    %109 = vector.load %arg7[%c40_55, %c0_56] : memref<72x256xf32, #tpu.memory_space<vmem>>, vector<8x256xf32>
    tpu.vector_store %arg7[%c40_55, %c0_56], %108 {strides = array<i32>} : memref<72x256xf32, #tpu.memory_space<vmem>>, vector<8x256xf32>,
    %c240_i32_57 = arith.constant 240 : i32
    %110 = tpu.dynamic_rotate %76 by %c240_i32_57 dim 1 : vector<8x256xf32>, i32 -> vector<8x256xf32>
    %c1_i32_58 = arith.constant 1 : i32
    %111 = tpu.dynamic_rotate %110 by %c1_i32_58 dim 1 : vector<8x256xf32>, i32 -> vector<8x256xf32>
    %112 = arith.andi %10, %4 : vector<1x256xi1>
    %cst_59 = arith.constant 0.000000e+00 : f32
    %113 = vector.shape_cast %112 : vector<1x256xi1> to vector<1x256xi1>
    %114 = vector.broadcast %113 : vector<1x256xi1> to vector<8x256xi1>
    %115 = vector.broadcast %cst_59 : f32 to vector<8x256xf32>
    %116 = arith.select %114, %111, %115 : vector<8x256xi1>, vector<8x256xf32>
    %c48_60 = arith.constant 48 : index
    %c0_61 = arith.constant 0 : index
    %117 = vector.load %arg7[%c48_60, %c0_61] : memref<72x256xf32, #tpu.memory_space<vmem>>, vector<8x256xf32>
    tpu.vector_store %arg7[%c48_60, %c0_61], %116 {strides = array<i32>} : memref<72x256xf32, #tpu.memory_space<vmem>>, vector<8x256xf32>,
    %cst_62 = arith.constant 0.000000e+00 : f32
    %118 = vector.shape_cast %10 : vector<1x256xi1> to vector<1x256xi1>
    %119 = vector.broadcast %118 : vector<1x256xi1> to vector<8x256xi1>
    %120 = vector.broadcast %cst_62 : f32 to vector<8x256xf32>
    %121 = arith.select %119, %110, %120 : vector<8x256xi1>, vector<8x256xf32>
    %c56_63 = arith.constant 56 : index
    %c0_64 = arith.constant 0 : index
    %122 = vector.load %arg7[%c56_63, %c0_64] : memref<72x256xf32, #tpu.memory_space<vmem>>, vector<8x256xf32>
    tpu.vector_store %arg7[%c56_63, %c0_64], %121 {strides = array<i32>} : memref<72x256xf32, #tpu.memory_space<vmem>>, vector<8x256xf32>,
    %c255_i32_65 = arith.constant 255 : i32
    %123 = tpu.dynamic_rotate %110 by %c255_i32_65 dim 1 : vector<8x256xf32>, i32 -> vector<8x256xf32>
    %124 = arith.andi %10, %6 : vector<1x256xi1>
    %cst_66 = arith.constant 0.000000e+00 : f32
    %125 = vector.shape_cast %124 : vector<1x256xi1> to vector<1x256xi1>
    %126 = vector.broadcast %125 : vector<1x256xi1> to vector<8x256xi1>
    %127 = vector.broadcast %cst_66 : f32 to vector<8x256xf32>
    %128 = arith.select %126, %123, %127 : vector<8x256xi1>, vector<8x256xf32>
    %c64_67 = arith.constant 64 : index
    %c0_68 = arith.constant 0 : index
    %129 = vector.load %arg7[%c64_67, %c0_68] : memref<72x256xf32, #tpu.memory_space<vmem>>, vector<8x256xf32>
    tpu.vector_store %arg7[%c64_67, %c0_68], %128 {strides = array<i32>} : memref<72x256xf32, #tpu.memory_space<vmem>>, vector<8x256xf32>,
    %c0_69 = arith.constant 0 : index
    %c0_70 = arith.constant 0 : index
    %130 = vector.load %arg4[%c0_69, %c0_70] : memref<8x72xf32, #tpu.memory_space<vmem>>, vector<8x72xf32>
    %c0_71 = arith.constant 0 : index
    %c0_72 = arith.constant 0 : index
    %131 = vector.load %arg7[%c0_71, %c0_72] : memref<72x256xf32, #tpu.memory_space<vmem>>, vector<72x256xf32>
    %cst_73 = arith.constant dense<0.000000e+00> : vector<8x256xf32>
    %132 = tpu.matmul %130, %131, %cst_73 {dimension_numbers = #tpu.dot_dimension_numbers<[1], [0], [0], [1], [0, 0, 1, 1], [], []>} : vector<8x72xf32>, vector<72x256xf32>, vector<8x256xf32> -> vector<8x256xf32>
    %c0_74 = arith.constant 0 : index
    %c0_75 = arith.constant 0 : index
    %133 = vector.load %arg5[%c0_74, %c0_75] : memref<8x1xf32, #tpu.memory_space<vmem>>, vector<8x1xf32>
    %134 = vector.broadcast %133 : vector<8x1xf32> to vector<8x256xf32>
    %135 = arith.addf %132, %134 : vector<8x256xf32>
    %cst_76 = arith.constant 0.000000e+00 : f32
    %136 = vector.broadcast %cst_76 : f32 to vector<8x256xf32>
    %137 = arith.cmpf ogt, %135, %136 : vector<8x256xf32>
    %cst_77 = arith.constant 6.000000e-01 : f32
    %138 = vector.broadcast %cst_77 : f32 to vector<8x256xf32>
    %139 = arith.mulf %138, %135 : vector<8x256xf32>
    %140 = arith.select %137, %135, %139 : vector<8x256xi1>, vector<8x256xf32>
    %141 = arith.addf %140, %12 : vector<8x256xf32>
    %c0_78 = arith.constant 0 : index
    %c0_79 = arith.constant 0 : index
    %c0_80 = arith.constant 0 : index
    %142 = vector.load %arg6[%c0_78, %c0_79, %c0_80] : memref<1x8x256xf32, #tpu.memory_space<vmem>>, vector<1x8x256xf32>
    %143 = vector.shape_cast %142 : vector<1x8x256xf32> to vector<8x256xf32>
    %144 = vector.shape_cast %141 : vector<8x256xf32> to vector<1x8x256xf32>
    tpu.vector_store %arg6[%c0_78, %c0_79, %c0_80], %144 {strides = array<i32>} : memref<1x8x256xf32, #tpu.memory_space<vmem>>, vector<1x8x256xf32>,
    return
  }
  func.func @transform_0(%arg0: i32) -> (i32, i32, i32) {
    %c0_i32 = arith.constant 0 : i32
    %c0_i32_0 = arith.constant 0 : i32
    %c0_i32_1 = arith.constant 0 : i32
    return %arg0, %c0_i32, %c0_i32_0 : i32, i32, i32
  }
  func.func @transform_1(%arg0: i32) -> (i32, i32) {
    %c0_i32 = arith.constant 0 : i32
    %c0_i32_0 = arith.constant 0 : i32
    %c0_i32_1 = arith.constant 0 : i32
    return %c0_i32, %c0_i32_0 : i32, i32
  }
  func.func @transform_2(%arg0: i32) -> (i32, i32) {
    %c0_i32 = arith.constant 0 : i32
    %c0_i32_0 = arith.constant 0 : i32
    %c0_i32_1 = arith.constant 0 : i32
    return %c0_i32, %c0_i32_0 : i32, i32
  }
  func.func @transform_3(%arg0: i32) -> (i32, i32) {
    %c0_i32 = arith.constant 0 : i32
    %c0_i32_0 = arith.constant 0 : i32
    %c0_i32_1 = arith.constant 0 : i32
    return %c0_i32, %c0_i32_0 : i32, i32
  }
  func.func @transform_4(%arg0: i32) -> (i32, i32) {
    %c0_i32 = arith.constant 0 : i32
    %c0_i32_0 = arith.constant 0 : i32
    %c0_i32_1 = arith.constant 0 : i32
    return %c0_i32, %c0_i32_0 : i32, i32
  }
  func.func @transform_5(%arg0: i32) -> (i32, i32, i32) {
    %c0_i32 = arith.constant 0 : i32
    %c0_i32_0 = arith.constant 0 : i32
    %c0_i32_1 = arith.constant 0 : i32
    return %arg0, %c0_i32, %c0_i32_0 : i32, i32, i32
  }
}

</mosaic_0001>

<llo_original>
// kernel: tpu_custom_call.1
$region0: #{tpu_custom_call.1}
  #allocation0 [shape = 'u32[]', space=smem, size = 0x4, offset = 0x4, fixed_abs, tag = 'smem constant byte address 0x4 - core index']
  #allocation1 [shape = 'u32[72,128]{1,0:T(1,128)}', space=vmem, size = 0x9000, scoped, tag = 'internal scratch']
  #allocation2 [shape = 'f32[72,256]{1,0:T(8,128)}', space=vmem, size = 0x12000, scoped, tag = 'scratch operand']
  %s0 = inlined_call_operand.hbm [shape: f32[2,8,256], index: 0, kind: input, shape index: {}]
  %s1 = inlined_call_operand.vmem [shape: f32[8,72], index: 1, kind: input, shape index: {}]
  %s2 = inlined_call_operand.vmem [shape: f32[8,1], index: 2, kind: input, shape index: {}]
  %s3 = inlined_call_operand.vmem [shape: f32[8,72], index: 3, kind: input, shape index: {}]
  %s4 = inlined_call_operand.vmem [shape: f32[8,1], index: 4, kind: input, shape index: {}]
  %s5 = inlined_call_operand.hbm [shape: f32[2,8,256], index: 5, kind: output, shape index: {}]
  %s6 = sld [smem:[#allocation0]]
  $region57: #{tpu_custom_call.1} parent=0
    _
  %s8 = ssub.s32 1, %s6
  %s9 = scalar_select 0, %s8, %s6
  $region1: #{tpu_custom_call.1} parent=0
    #allocation3 [shape = 'u8[16384]{0}', space=vmem, size = 0x4000, scoped, tag = 'input window, operand 0']
    #allocation4 [shape = 's32[2]{0}', space=sflag, size = 0x8, scoped, tag = 'scoped memory for tpu_custom_call.1']
    #allocation5 [shape = 's32[2]{0}', space=sflag, size = 0x8, scoped, tag = 'scoped memory for tpu_custom_call.1']
    #allocation6 [shape = 'u8[16384]{0}', space=vmem, size = 0x4000, scoped, tag = 'output window, operand 0']
    %10 = vsyncpa [#allocation4], 0
    %s11 = scalar_lea.sflag [#allocation4], 1
    %12 = vsyncpa %s11, 0
    %13 = vsyncpa [#allocation5], 0
    %s14 = scalar_lea.sflag [#allocation5], 1
    %15 = vsyncpa %s14, 0
    loop: start=0, step=1, limit=4
    $region2: #{tpu_custom_call.1} parent=1 // loop_pre_header
      _
    $region3: #{tpu_custom_call.1} parent=1 // loop_header
      %s17 = sphi 0, %s21
      %p18 = scmp.ge.s32.totalorder %s17, 4
      %s27 = sphi 0, %s29
      %s30 = sphi 0, %s27
      %s31 = sphi 0, %s30
      %s47 = sphi 0, %s31
      %s51 = sphi 0, %s51
      %s53 = sphi 0, %s51
      %s54 = sphi 0, %s53
      %s68 = sphi 0, %s54
      %s72 = sphi 0, %s72
      %s74 = sphi 0, %s72
      %s75 = sphi 0, %s74
      %s89 = sphi 0, %s75
      %s93 = sphi 0, %s93
      %s95 = sphi 0, %s93
      %s96 = sphi 0, %s95
      %s110 = sphi 0, %s96
      %s114 = sphi 0, %s114
      %s116 = sphi 0, %s114
      %s117 = sphi 0, %s116
      %s131 = sphi 0, %s117
      %s137 = sphi 0, %s139
      %s140 = sphi 0, %s137
      %s141 = sphi 0, %s140
      %s157 = sphi 0, %s141
    $region4: #{tpu_custom_call.1} parent=1 // loop_header_branch
      %20 = sbr.rel (%p18) target = $region8
    $region5: #{tpu_custom_call.1} parent=1 // loop_body
      %s22 = ssub.s32 %s17, 1
      %s23 = ssub.s32 %s17, 2
      %s24 = sadd.s32 %s17, 1
      %s25 = ssub.s32 %s17, %s24
      %p26 = scmp.eq.s32.totalorder %s25, 0
      %s28 = sadd.s32 %s27, 1
      %s29 = scalar_select %p26, %s27, %s28
      %p32 = pneg %p26
      %p33 = scmp.eq.s32.totalorder %s17, 1
      %p34 = por %p32, %p33
      %p35 = scmp.ne.s32.totalorder %s27, %s30
      %p36 = scmp.eq.s32.totalorder %s17, 0
      %p37 = por %p35, %p36
      %p38 = scmp.ne.s32.totalorder %s27, %s30
      %p39 = scmp.eq.s32.totalorder %s22, 1
      %p40 = por %p38, %p39
      %p41 = scmp.ne.s32.totalorder %s30, %s31
      %p42 = scmp.eq.s32.totalorder %s22, 0
      %p43 = por %p41, %p42
      %p44 = scmp.ne.s32.totalorder %s30, %s31
      %p45 = scmp.eq.s32.totalorder %s23, 1
      %p46 = por %p44, %p45
      %p48 = scmp.ne.s32.totalorder %s31, %s47
      %p49 = scmp.eq.s32.totalorder %s23, 0
      %p50 = por %p48, %p49
      %s52 = sadd.s32 %s51, 1
      %p55 = scmp.eq.s32.totalorder %s17, 1
      %p56 = scmp.ne.s32.totalorder %s51, %s53
      %p57 = scmp.eq.s32.totalorder %s17, 0
      %p58 = por %p56, %p57
      %p59 = scmp.ne.s32.totalorder %s51, %s53
      %p60 = scmp.eq.s32.totalorder %s22, 1
      %p61 = por %p59, %p60
      %p62 = scmp.ne.s32.totalorder %s53, %s54
      %p63 = scmp.eq.s32.totalorder %s22, 0
      %p64 = por %p62, %p63
      %p65 = scmp.ne.s32.totalorder %s53, %s54
      %p66 = scmp.eq.s32.totalorder %s23, 1
      %p67 = por %p65, %p66
      %p69 = scmp.ne.s32.totalorder %s54, %s68
      %p70 = scmp.eq.s32.totalorder %s23, 0
      %p71 = por %p69, %p70
      %s73 = sadd.s32 %s72, 1
      %p76 = scmp.eq.s32.totalorder %s17, 1
      %p77 = scmp.ne.s32.totalorder %s72, %s74
      %p78 = scmp.eq.s32.totalorder %s17, 0
      %p79 = por %p77, %p78
      %p80 = scmp.ne.s32.totalorder %s72, %s74
      %p81 = scmp.eq.s32.totalorder %s22, 1
      %p82 = por %p80, %p81
      %p83 = scmp.ne.s32.totalorder %s74, %s75
      %p84 = scmp.eq.s32.totalorder %s22, 0
      %p85 = por %p83, %p84
      %p86 = scmp.ne.s32.totalorder %s74, %s75
      %p87 = scmp.eq.s32.totalorder %s23, 1
      %p88 = por %p86, %p87
      %p90 = scmp.ne.s32.totalorder %s75, %s89
      %p91 = scmp.eq.s32.totalorder %s23, 0
      %p92 = por %p90, %p91
      %s94 = sadd.s32 %s93, 1
      %p97 = scmp.eq.s32.totalorder %s17, 1
      %p98 = scmp.ne.s32.totalorder %s93, %s95
      %p99 = scmp.eq.s32.totalorder %s17, 0
      %p100 = por %p98, %p99
      %p101 = scmp.ne.s32.totalorder %s93, %s95
      %p102 = scmp.eq.s32.totalorder %s22, 1
      %p103 = por %p101, %p102
      %p104 = scmp.ne.s32.totalorder %s95, %s96
      %p105 = scmp.eq.s32.totalorder %s22, 0
      %p106 = por %p104, %p105
      %p107 = scmp.ne.s32.totalorder %s95, %s96
      %p108 = scmp.eq.s32.totalorder %s23, 1
      %p109 = por %p107, %p108
      %p111 = scmp.ne.s32.totalorder %s96, %s110
      %p112 = scmp.eq.s32.totalorder %s23, 0
      %p113 = por %p111, %p112
      %s115 = sadd.s32 %s114, 1
      %p118 = scmp.eq.s32.totalorder %s17, 1
      %p119 = scmp.ne.s32.totalorder %s114, %s116
      %p120 = scmp.eq.s32.totalorder %s17, 0
      %p121 = por %p119, %p120
      %p122 = scmp.ne.s32.totalorder %s114, %s116
      %p123 = scmp.eq.s32.totalorder %s22, 1
      %p124 = por %p122, %p123
      %p125 = scmp.ne.s32.totalorder %s116, %s117
      %p126 = scmp.eq.s32.totalorder %s22, 0
      %p127 = por %p125, %p126
      %p128 = scmp.ne.s32.totalorder %s116, %s117
      %p129 = scmp.eq.s32.totalorder %s23, 1
      %p130 = por %p128, %p129
      %p132 = scmp.ne.s32.totalorder %s117, %s131
      %p133 = scmp.eq.s32.totalorder %s23, 0
      %p134 = por %p132, %p133
      %s135 = ssub.s32 %s17, %s24
      %p136 = scmp.eq.s32.totalorder %s135, 0
      %s138 = sadd.s32 %s137, 1
      %s139 = scalar_select %p136, %s137, %s138
      %p142 = pneg %p136
      %p143 = scmp.eq.s32.totalorder %s17, 1
      %p144 = por %p142, %p143
      %p145 = scmp.ne.s32.totalorder %s137, %s140
      %p146 = scmp.eq.s32.totalorder %s17, 0
      %p147 = por %p145, %p146
      %p148 = scmp.ne.s32.totalorder %s137, %s140
      %p149 = scmp.eq.s32.totalorder %s22, 1
      %p150 = por %p148, %p149
      %p151 = scmp.ne.s32.totalorder %s140, %s141
      %p152 = scmp.eq.s32.totalorder %s22, 0
      %p153 = por %p151, %p152
      %p154 = scmp.ne.s32.totalorder %s140, %s141
      %p155 = scmp.eq.s32.totalorder %s23, 1
      %p156 = por %p154, %p155
      %p158 = scmp.ne.s32.totalorder %s141, %s157
      %p159 = scmp.eq.s32.totalorder %s23, 0
      %p160 = por %p158, %p159
      %p161 = scmp.le.s32.totalorder 1, %s17
      %p162 = scmp.lt.s32.totalorder %s17, 3
      %p163 = pnand %p161, %p162
      %p164 = pneg %p163
      // Predicated region
      $region9: #{tpu_custom_call.1} parent=5 // pred_check
        _
      $region10: #{tpu_custom_call.1} parent=5 // pred_check_branch
        %166 = sbr.rel (%p163) target = $region12
      $region11: #{tpu_custom_call.1} parent=5 // pred_region
        %s167 = ssub.s32 %s17, 1
        // Predicated region
        $region13: #{tpu_custom_call.1} parent=11 // pred_check
          %p168 = pneg %p64
        $region14: #{tpu_custom_call.1} parent=11 // pred_check_branch
          %170 = sbr.rel (%p168) target = $region16
        $region15: #{tpu_custom_call.1} parent=11 // pred_region
          _
        $region16: #{tpu_custom_call.1} parent=11 // pred_fallthru
          _
        // Predicated region
        $region17: #{tpu_custom_call.1} parent=11 // pred_check
          %p171 = pneg %p85
        $region18: #{tpu_custom_call.1} parent=11 // pred_check_branch
          %173 = sbr.rel (%p171) target = $region20
        $region19: #{tpu_custom_call.1} parent=11 // pred_region
          _
        $region20: #{tpu_custom_call.1} parent=11 // pred_fallthru
          _
        // Predicated region
        $region21: #{tpu_custom_call.1} parent=11 // pred_check
          %p174 = pneg %p106
        $region22: #{tpu_custom_call.1} parent=11 // pred_check_branch
          %176 = sbr.rel (%p174) target = $region24
        $region23: #{tpu_custom_call.1} parent=11 // pred_region
          _
        $region24: #{tpu_custom_call.1} parent=11 // pred_fallthru
          _
        // Predicated region
        $region25: #{tpu_custom_call.1} parent=11 // pred_check
          %p177 = pneg %p127
        $region26: #{tpu_custom_call.1} parent=11 // pred_check_branch
          %179 = sbr.rel (%p177) target = $region28
        $region27: #{tpu_custom_call.1} parent=11 // pred_region
          _
        $region28: #{tpu_custom_call.1} parent=11 // pred_fallthru
          _
      $region12: #{tpu_custom_call.1} parent=5 // pred_fallthru
        _
      %p180 = scmp.lt.s32.totalorder %s17, 2
      // Predicated region
      $region29: #{tpu_custom_call.1} parent=5 // pred_check
        %p181 = pneg %p180
      $region30: #{tpu_custom_call.1} parent=5 // pred_check_branch
        %183 = sbr.rel (%p181) target = $region32
      $region31: #{tpu_custom_call.1} parent=5 // pred_region
        // Predicated region
        $region33: #{tpu_custom_call.1} parent=31 // pred_check
          %p184 = pneg %p37
        $region34: #{tpu_custom_call.1} parent=31 // pred_check_branch
          %186 = sbr.rel (%p184) target = $region36
        $region35: #{tpu_custom_call.1} parent=31 // pred_region
          %s187 = sand.u32 %s27, 1
          %s188 = scalar_lea.sflag [#allocation4], %s187
          %s189 = sand.u32 %s27, 1
          %s190 = smul.addr %s189, 16
          %s191 = scalar_lea.vmem [#allocation3], %s190
          %193 = vsyncadd %s188, 0
          %s194 = smul.addr %s17, 2
          %s195 = smul.addr %s194, 8
          %s196 = scalar_lea.hbm %s0, %s195
          %s198 = sshll.u32 %s196, 4
          %s199 = int_to_ptr.hbm [resolvable:$true] %s198
          %s200 = sshll.u32 %s191, 4
          %s201 = int_to_ptr.vmem [resolvable:$true] %s200
          %203 = dma.hbm_to_vmem [thread:$0]  %s199, 256, %s201, %s188
        $region36: #{tpu_custom_call.1} parent=31 // pred_fallthru
          _
      $region32: #{tpu_custom_call.1} parent=5 // pred_fallthru
        _
      %p204 = scmp.le.s32.totalorder 1, %s17
      %p205 = scmp.lt.s32.totalorder %s17, 3
      %p206 = pnand %p204, %p205
      %p207 = pneg %p206
      // Predicated region
      $region37: #{tpu_custom_call.1} parent=5 // pred_check
        _
      $region38: #{tpu_custom_call.1} parent=5 // pred_check_branch
        %209 = sbr.rel (%p206) target = $region40
      $region39: #{tpu_custom_call.1} parent=5 // pred_region
        %s210 = ssub.s32 %s17, 1
        %s211 = sand.u32 %s30, 1
        %s212 = scalar_lea.sflag [#allocation4], %s211
        %s213 = sand.u32 %s30, 1
        %s214 = smul.addr %s213, 16
        %s215 = scalar_lea.vmem [#allocation3], %s214
        // Predicated region
        $region41: #{tpu_custom_call.1} parent=39 // pred_check
          %p216 = pneg %p43
        $region42: #{tpu_custom_call.1} parent=39 // pred_check_branch
          %218 = sbr.rel (%p216) target = $region44
        $region43: #{tpu_custom_call.1} parent=39 // pred_region
          %220 = dma.done %s212, 256
        $region44: #{tpu_custom_call.1} parent=39 // pred_fallthru
          _
        %s221 = sand.u32 %s30, 1
        %s222 = scalar_lea.sflag [#allocation4], %s221
        %s223 = sand.u32 %s30, 1
        %s224 = smul.addr %s223, 16
        %s225 = scalar_lea.vmem [#allocation3], %s224
        %p226 = pneg %p43
        %p227 = pneg %p40
        %p228 = pneg %p64
        %p229 = pneg %p61
        %p230 = pneg %p85
        %p231 = pneg %p82
        %p232 = pneg %p106
        %p233 = pneg %p103
        %p234 = pneg %p127
        %p235 = pneg %p124
        %p236 = pneg %p153
        %p237 = pneg %p150
        %s238 = sand.u32 %s140, 1
        %s239 = scalar_lea.sflag [#allocation5], %s238
        %s240 = sand.u32 %s140, 1
        %s241 = smul.addr %s240, 16
        %s242 = scalar_lea.vmem [#allocation6], %s241
        %v243 = vlaneseq
        %v244 = vand.u32 %v243, 127
        %v245 = vadd.s32 %v244, 128
        %v246 = vand.u32 %v244, 15
        %v247 = vand.u32 %v245, 15
        %vm248 = vcmp.ge.s32.totalorder %v246, 1
        %vm249 = vcmp.ge.s32.totalorder %v247, 1
        %vm250 = vcmp.le.s32.totalorder %v246, 14
        %vm251 = vcmp.le.s32.totalorder %v247, 14
        %vm252 = vcmp.ge.s32.totalorder %v244, 16
        %vm253 = vcmp.ge.s32.totalorder %v245, 16
        %vm254 = vcmp.lt.s32.totalorder %v244, 240
        %vm255 = vcmp.lt.s32.totalorder %v245, 240
        %v256 = vld [vmem:[%s215] sm:$0xff]
        %v257 = vld [vmem:[%s215 + $0x8] sm:$0xff]
        %258 = vrot.lane.b32.xlu0 %v256, 16
        %v259 = vpop.permute.xlu0 %258
        %260 = vrot.lane.b32.xlu0 %v257, 16
        %v261 = vpop.permute.xlu0 %260
        %vm262 = vcmp.lt.s32.totalorder %v244, 16
        %v263 = vsel %vm262, %v259, %v261
        %v264 = vsel %vm262, %v261, %v259
        %265 = vrot.lane.b32.xlu0 %v264, 1
        %v266 = vpop.permute.xlu0 %265
        %267 = vrot.lane.b32.xlu0 %v263, 1
        %v268 = vpop.permute.xlu0 %267
        %vm269 = vcmp.lt.s32.totalorder %v244, 1
        %v270 = vsel %vm269, %v266, %v268
        %v271 = vsel %vm269, %v268, %v266
        %vm272 = vmand %vm252, %vm248
        %vm273 = vmand %vm253, %vm249
        %v274 = vsel %vm272, 1, 0
        %v275 = vsel %vm273, 1, 0
        %vm276 = vcmp.eq.s32.totalorder %v274, 1
        %vm277 = vcmp.eq.s32.totalorder %v275, 1
        %v278 = vsel %vm276, %v271, 0.0
        %v279 = vsel %vm277, %v270, 0.0
        %280 = vst [vmem:[#allocation2] sm:$0xff] %v278
        %281 = vst [vmem:[#allocation2 + $0x8] sm:$0xff] %v279
        %v282 = vsel %vm252, 1, 0
        %v283 = vsel %vm253, 1, 0
        %vm284 = vcmp.eq.s32.totalorder %v282, 1
        %vm285 = vcmp.eq.s32.totalorder %v283, 1
        %v286 = vsel %vm284, %v264, 0.0
        %v287 = vsel %vm285, %v263, 0.0
        %288 = vst [vmem:[#allocation2 + $0x10] sm:$0xff] %v286
        %289 = vst [vmem:[#allocation2 + $0x18] sm:$0xff] %v287
        %290 = vrot.lane.b32.xlu0 %v264, 127
        %v291 = vpop.permute.xlu0 %290
        %292 = vrot.lane.b32.xlu0 %v263, 127
        %v293 = vpop.permute.xlu0 %292
        %vm294 = vcmp.lt.s32.totalorder %v244, 127
        %v295 = vsel %vm294, %v291, %v293
        %v296 = vsel %vm294, %v293, %v291
        %vm297 = vmand %vm252, %vm250
        %vm298 = vmand %vm253, %vm251
        %v299 = vsel %vm297, 1, 0
        %v300 = vsel %vm298, 1, 0
        %vm301 = vcmp.eq.s32.totalorder %v299, 1
        %vm302 = vcmp.eq.s32.totalorder %v300, 1
        %v303 = vsel %vm301, %v295, 0.0
        %v304 = vsel %vm302, %v296, 0.0
        %305 = vst [vmem:[#allocation2 + $0x20] sm:$0xff] %v303
        %306 = vst [vmem:[#allocation2 + $0x28] sm:$0xff] %v304
        %307 = vrot.lane.b32.xlu0 %v256, 1
        %v308 = vpop.permute.xlu0 %307
        %309 = vrot.lane.b32.xlu0 %v257, 1
        %v310 = vpop.permute.xlu0 %309
        %v311 = vsel %vm269, %v308, %v310
        %v312 = vsel %vm269, %v310, %v308
        %v313 = vsel %vm248, 1, 0
        %v314 = vsel %vm249, 1, 0
        %vm315 = vcmp.eq.s32.totalorder %v313, 1
        %vm316 = vcmp.eq.s32.totalorder %v314, 1
        %v317 = vsel %vm315, %v312, 0.0
        %v318 = vsel %vm316, %v311, 0.0
        %319 = vst [vmem:[#allocation2 + $0x30] sm:$0xff] %v317
        %320 = vst [vmem:[#allocation2 + $0x38] sm:$0xff] %v318
        %321 = vst [vmem:[#allocation2 + $0x40] sm:$0xff] %v256
        %322 = vst [vmem:[#allocation2 + $0x48] sm:$0xff] %v257
        %323 = vrot.lane.b32.xlu0 %v256, 127
        %v324 = vpop.permute.xlu0 %323
        %325 = vrot.lane.b32.xlu0 %v257, 127
        %v326 = vpop.permute.xlu0 %325
        %v327 = vsel %vm294, %v324, %v326
        %v328 = vsel %vm294, %v326, %v324
        %v329 = vsel %vm250, 1, 0
        %v330 = vsel %vm251, 1, 0
        %vm331 = vcmp.eq.s32.totalorder %v329, 1
        %vm332 = vcmp.eq.s32.totalorder %v330, 1
        %v333 = vsel %vm331, %v327, 0.0
        %v334 = vsel %vm332, %v328, 0.0
        %335 = vst [vmem:[#allocation2 + $0x50] sm:$0xff] %v333
        %336 = vst [vmem:[#allocation2 + $0x58] sm:$0xff] %v334
        %337 = vrot.lane.b32.xlu0 %v256, 112
        %v338 = vpop.permute.xlu0 %337
        %339 = vrot.lane.b32.xlu0 %v257, 112
        %v340 = vpop.permute.xlu0 %339
        %vm341 = vcmp.lt.s32.totalorder %v244, 112
        %v342 = vsel %vm341, %v338, %v340
        %v343 = vsel %vm341, %v340, %v338
        %344 = vrot.lane.b32.xlu0 %v342, 1
        %v345 = vpop.permute.xlu0 %344
        %346 = vrot.lane.b32.xlu0 %v343, 1
        %v347 = vpop.permute.xlu0 %346
        %v348 = vsel %vm269, %v345, %v347
        %v349 = vsel %vm269, %v347, %v345
        %vm350 = vmand %vm254, %vm248
        %vm351 = vmand %vm255, %vm249
        %v352 = vsel %vm350, 1, 0
        %v353 = vsel %vm351, 1, 0
        %vm354 = vcmp.eq.s32.totalorder %v352, 1
        %vm355 = vcmp.eq.s32.totalorder %v353, 1
        %v356 = vsel %vm354, %v349, 0.0
        %v357 = vsel %vm355, %v348, 0.0
        %358 = vst [vmem:[#allocation2 + $0x60] sm:$0xff] %v356
        %359 = vst [vmem:[#allocation2 + $0x68] sm:$0xff] %v357
        %v360 = vsel %vm254, 1, 0
        %v361 = vsel %vm255, 1, 0
        %vm362 = vcmp.eq.s32.totalorder %v360, 1
        %vm363 = vcmp.eq.s32.totalorder %v361, 1
        %v364 = vsel %vm362, %v342, 0.0
        %v365 = vsel %vm363, %v343, 0.0
        %366 = vst [vmem:[#allocation2 + $0x70] sm:$0xff] %v364
        %367 = vst [vmem:[#allocation2 + $0x78] sm:$0xff] %v365
        %368 = vrot.lane.b32.xlu0 %v342, 127
        %v369 = vpop.permute.xlu0 %368
        %370 = vrot.lane.b32.xlu0 %v343, 127
        %v371 = vpop.permute.xlu0 %370
        %v372 = vsel %vm294, %v369, %v371
        %v373 = vsel %vm294, %v371, %v369
        %vm374 = vmand %vm254, %vm250
        %vm375 = vmand %vm255, %vm251
        %v376 = vsel %vm374, 1, 0
        %v377 = vsel %vm375, 1, 0
        %vm378 = vcmp.eq.s32.totalorder %v376, 1
        %vm379 = vcmp.eq.s32.totalorder %v377, 1
        %v380 = vsel %vm378, %v372, 0.0
        %v381 = vsel %vm379, %v373, 0.0
        %382 = vst [vmem:[#allocation2 + $0x80] sm:$0xff] %v380
        %383 = vst [vmem:[#allocation2 + $0x88] sm:$0xff] %v381
        %v384 = vld [vmem:[%s1] sm:$0xff]
        %v385 = vld [vmem:[#allocation2] sm:$0xff]
        %v386 = vld [vmem:[#allocation2 + $0x8] sm:$0xff]
        %v387 = vld [vmem:[#allocation2 + $0x10] sm:$0xff]
        %v388 = vld [vmem:[#allocation2 + $0x18] sm:$0xff]
        %v389 = vld [vmem:[#allocation2 + $0x20] sm:$0xff]
        %v390 = vld [vmem:[#allocation2 + $0x28] sm:$0xff]
        %v391 = vld [vmem:[#allocation2 + $0x30] sm:$0xff]
        %v392 = vld [vmem:[#allocation2 + $0x38] sm:$0xff]
        %v393 = vld [vmem:[#allocation2 + $0x40] sm:$0xff]
        %v394 = vld [vmem:[#allocation2 + $0x48] sm:$0xff]
        %v395 = vld [vmem:[#allocation2 + $0x50] sm:$0xff]
        %v396 = vld [vmem:[#allocation2 + $0x58] sm:$0xff]
        %v397 = vld [vmem:[#allocation2 + $0x60] sm:$0xff]
        %v398 = vld [vmem:[#allocation2 + $0x68] sm:$0xff]
        %v399 = vld [vmem:[#allocation2 + $0x70] sm:$0xff]
        %v400 = vld [vmem:[#allocation2 + $0x78] sm:$0xff]
        %v401 = vld [vmem:[#allocation2 + $0x80] sm:$0xff]
        %v402 = vld [vmem:[#allocation2 + $0x88] sm:$0xff]
        %v403 = vld [vmem:[%s2] sm:$0xff]
        %405 = vset.pattern.permute.xlu0 0
        %406 = vperm.xlu0 %405, %v403
        %v407 = vpop.permute.xlu0 %406
        %vm409 = vcmask 588800
        %v411 = vsel %vm409, %v384, 0
        %413 = vmatpush.msra.mxu0 0.0
        %414 = vmatpush.msra.mxu0 0.0
        %415 = vmatpush.msra.mxu0 0.0
        %416 = vmatpush.msra.mxu0 0.0
        %417 = vmatpush.msra.mxu0 0.0
        %418 = vmatpush.msra.mxu0 0.0
        %419 = vmatpush.msra.mxu0 0.0
        %420 = vmatpush.msra.mxu0 %v401
        %421 = vmatpush.msra.mxu0 %v399
        %422 = vmatpush.msra.mxu0 %v397
        %423 = vmatpush.msra.mxu0 %v395
        %424 = vmatpush.msra.mxu0 %v393
        %425 = vmatpush.msra.mxu0 %v391
        %426 = vmatpush.msra.mxu0 %v389
        %427 = vmatpush.msra.mxu0 %v387
        %428 = vmatpush.msra.mxu0 %v385
        %429 = vmatmul.f32.gmra.mxu0 %v411
        %v430 = vpop.f32.mrf.mxu0
        %v431 = vadd.f32 %v407, %v430
        %432 = vdwg.mxu0
        %433 = vmatpush.msra.mxu0 0.0
        %434 = vmatpush.msra.mxu0 0.0
        %435 = vmatpush.msra.mxu0 0.0
        %436 = vmatpush.msra.mxu0 0.0
        %437 = vmatpush.msra.mxu0 0.0
        %438 = vmatpush.msra.mxu0 0.0
        %439 = vmatpush.msra.mxu0 0.0
        %440 = vmatpush.msra.mxu0 %v402
        %441 = vmatpush.msra.mxu0 %v400
        %442 = vmatpush.msra.mxu0 %v398
        %443 = vmatpush.msra.mxu0 %v396
        %444 = vmatpush.msra.mxu0 %v394
        %445 = vmatpush.msra.mxu0 %v392
        %446 = vmatpush.msra.mxu0 %v390
        %447 = vmatpush.msra.mxu0 %v388
        %448 = vmatpush.msra.mxu0 %v386
        %449 = vmatmul.f32.gmra.mxu0 %v411
        %v450 = vpop.f32.mrf.mxu0
        %v451 = vadd.f32 %v407, %v450
        %452 = vdwg.mxu0
        %vm453 = vcmp.gt.f32.partialorder %v431, 0.0
        %vm454 = vcmp.gt.f32.partialorder %v451, 0.0
        %v455 = vmul.f32 %v431, 0.6
        %v456 = vmul.f32 %v451, 0.6
        %v457 = vsel %vm453, %v431, %v455
        %v458 = vsel %vm454, %v451, %v456
        %459 = vrot.lane.b32.xlu0 %v457, 16
        %v460 = vpop.permute.xlu0 %459
        %461 = vrot.lane.b32.xlu0 %v458, 16
        %v462 = vpop.permute.xlu0 %461
        %v463 = vsel %vm262, %v460, %v462
        %v464 = vsel %vm262, %v462, %v460
        %465 = vrot.lane.b32.xlu0 %v464, 1
        %v466 = vpop.permute.xlu0 %465
        %467 = vrot.lane.b32.xlu0 %v463, 1
        %v468 = vpop.permute.xlu0 %467
        %v469 = vsel %vm269, %v466, %v468
        %v470 = vsel %vm269, %v468, %v466
        %v471 = vsel %vm276, %v470, 0.0
        %v472 = vsel %vm277, %v469, 0.0
        %473 = vst [vmem:[#allocation2] sm:$0xff] %v471
        %474 = vst [vmem:[#allocation2 + $0x8] sm:$0xff] %v472
        %v475 = vsel %vm284, %v464, 0.0
        %v476 = vsel %vm285, %v463, 0.0
        %477 = vst [vmem:[#allocation2 + $0x10] sm:$0xff] %v475
        %478 = vst [vmem:[#allocation2 + $0x18] sm:$0xff] %v476
        %479 = vrot.lane.b32.xlu0 %v464, 127
        %v480 = vpop.permute.xlu0 %479
        %481 = vrot.lane.b32.xlu0 %v463, 127
        %v482 = vpop.permute.xlu0 %481
        %v483 = vsel %vm294, %v480, %v482
        %v484 = vsel %vm294, %v482, %v480
        %v485 = vsel %vm301, %v483, 0.0
        %v486 = vsel %vm302, %v484, 0.0
        %487 = vst [vmem:[#allocation2 + $0x20] sm:$0xff] %v485
        %488 = vst [vmem:[#allocation2 + $0x28] sm:$0xff] %v486
        %489 = vrot.lane.b32.xlu0 %v457, 1
        %v490 = vpop.permute.xlu0 %489
        %491 = vrot.lane.b32.xlu0 %v458, 1
        %v492 = vpop.permute.xlu0 %491
        %v493 = vsel %vm269, %v490, %v492
        %v494 = vsel %vm269, %v492, %v490
        %v495 = vsel %vm315, %v494, 0.0
        %v496 = vsel %vm316, %v493, 0.0
        %497 = vst [vmem:[#allocation2 + $0x30] sm:$0xff] %v495
        %498 = vst [vmem:[#allocation2 + $0x38] sm:$0xff] %v496
        %499 = vst [vmem:[#allocation2 + $0x40] sm:$0xff] %v457
        %500 = vst [vmem:[#allocation2 + $0x48] sm:$0xff] %v458
        %501 = vrot.lane.b32.xlu0 %v457, 127
        %v502 = vpop.permute.xlu0 %501
        %503 = vrot.lane.b32.xlu0 %v458, 127
        %v504 = vpop.permute.xlu0 %503
        %v505 = vsel %vm294, %v502, %v504
        %v506 = vsel %vm294, %v504, %v502
        %v507 = vsel %vm331, %v505, 0.0
        %v508 = vsel %vm332, %v506, 0.0
        %509 = vst [vmem:[#allocation2 + $0x50] sm:$0xff] %v507
        %510 = vst [vmem:[#allocation2 + $0x58] sm:$0xff] %v508
        %511 = vrot.lane.b32.xlu0 %v457, 112
        %v512 = vpop.permute.xlu0 %511
        %513 = vrot.lane.b32.xlu0 %v458, 112
        %v514 = vpop.permute.xlu0 %513
        %v515 = vsel %vm341, %v512, %v514
        %v516 = vsel %vm341, %v514, %v512
        %517 = vrot.lane.b32.xlu0 %v515, 1
        %v518 = vpop.permute.xlu0 %517
        %519 = vrot.lane.b32.xlu0 %v516, 1
        %v520 = vpop.permute.xlu0 %519
        %v521 = vsel %vm269, %v518, %v520
        %v522 = vsel %vm269, %v520, %v518
        %v523 = vsel %vm354, %v522, 0.0
        %v524 = vsel %vm355, %v521, 0.0
        %525 = vst [vmem:[#allocation2 + $0x60] sm:$0xff] %v523
        %526 = vst [vmem:[#allocation2 + $0x68] sm:$0xff] %v524
        %v527 = vsel %vm362, %v515, 0.0
        %v528 = vsel %vm363, %v516, 0.0
        %529 = vst [vmem:[#allocation2 + $0x70] sm:$0xff] %v527
        %530 = vst [vmem:[#allocation2 + $0x78] sm:$0xff] %v528
        %531 = vrot.lane.b32.xlu0 %v515, 127
        %v532 = vpop.permute.xlu0 %531
        %533 = vrot.lane.b32.xlu0 %v516, 127
        %v534 = vpop.permute.xlu0 %533
        %v535 = vsel %vm294, %v532, %v534
        %v536 = vsel %vm294, %v534, %v532
        %v537 = vsel %vm378, %v535, 0.0
        %v538 = vsel %vm379, %v536, 0.0
        %539 = vst [vmem:[#allocation2 + $0x80] sm:$0xff] %v537
        %540 = vst [vmem:[#allocation2 + $0x88] sm:$0xff] %v538
        %v541 = vld [vmem:[%s3] sm:$0xff]
        %v542 = vld [vmem:[#allocation2] sm:$0xff]
        %v543 = vld [vmem:[#allocation2 + $0x8] sm:$0xff]
        %v544 = vld [vmem:[#allocation2 + $0x10] sm:$0xff]
        %v545 = vld [vmem:[#allocation2 + $0x18] sm:$0xff]
        %v546 = vld [vmem:[#allocation2 + $0x20] sm:$0xff]
        %v547 = vld [vmem:[#allocation2 + $0x28] sm:$0xff]
        %v548 = vld [vmem:[#allocation2 + $0x30] sm:$0xff]
        %v549 = vld [vmem:[#allocation2 + $0x38] sm:$0xff]
        %v550 = vld [vmem:[#allocation2 + $0x40] sm:$0xff]
        %v551 = vld [vmem:[#allocation2 + $0x48] sm:$0xff]
        %v552 = vld [vmem:[#allocation2 + $0x50] sm:$0xff]
        %v553 = vld [vmem:[#allocation2 + $0x58] sm:$0xff]
        %v554 = vld [vmem:[#allocation2 + $0x60] sm:$0xff]
        %v555 = vld [vmem:[#allocation2 + $0x68] sm:$0xff]
        %v556 = vld [vmem:[#allocation2 + $0x70] sm:$0xff]
        %v557 = vld [vmem:[#allocation2 + $0x78] sm:$0xff]
        %v558 = vld [vmem:[#allocation2 + $0x80] sm:$0xff]
        %v559 = vld [vmem:[#allocation2 + $0x88] sm:$0xff]
        %v560 = vld [vmem:[%s4] sm:$0xff]
        %562 = vset.pattern.permute.xlu0 0
        %563 = vperm.xlu0 %562, %v560
        %v564 = vpop.permute.xlu0 %563
        %v567 = vsel %vm409, %v541, 0
        %569 = vmatpush.msra.mxu0 0.0
        %570 = vmatpush.msra.mxu0 0.0
        %571 = vmatpush.msra.mxu0 0.0
        %572 = vmatpush.msra.mxu0 0.0
        %573 = vmatpush.msra.mxu0 0.0
        %574 = vmatpush.msra.mxu0 0.0
        %575 = vmatpush.msra.mxu0 0.0
        %576 = vmatpush.msra.mxu0 %v558
        %577 = vmatpush.msra.mxu0 %v556
        %578 = vmatpush.msra.mxu0 %v554
        %579 = vmatpush.msra.mxu0 %v552
        %580 = vmatpush.msra.mxu0 %v550
        %581 = vmatpush.msra.mxu0 %v548
        %582 = vmatpush.msra.mxu0 %v546
        %583 = vmatpush.msra.mxu0 %v544
        %584 = vmatpush.msra.mxu0 %v542
        %585 = vmatmul.f32.gmra.mxu0 %v567
        %v586 = vpop.f32.mrf.mxu0
        %v587 = vadd.f32 %v564, %v586
        %588 = vdwg.mxu0
        %589 = vmatpush.msra.mxu0 0.0
        %590 = vmatpush.msra.mxu0 0.0
        %591 = vmatpush.msra.mxu0 0.0
        %592 = vmatpush.msra.mxu0 0.0
        %593 = vmatpush.msra.mxu0 0.0
        %594 = vmatpush.msra.mxu0 0.0
        %595 = vmatpush.msra.mxu0 0.0
        %596 = vmatpush.msra.mxu0 %v559
        %597 = vmatpush.msra.mxu0 %v557
        %598 = vmatpush.msra.mxu0 %v555
        %599 = vmatpush.msra.mxu0 %v553
        %600 = vmatpush.msra.mxu0 %v551
        %601 = vmatpush.msra.mxu0 %v549
        %602 = vmatpush.msra.mxu0 %v547
        %603 = vmatpush.msra.mxu0 %v545
        %604 = vmatpush.msra.mxu0 %v543
        %605 = vmatmul.f32.gmra.mxu0 %v567
        %v606 = vpop.f32.mrf.mxu0
        %v607 = vadd.f32 %v564, %v606
        %608 = vdwg.mxu0
        %vm609 = vcmp.gt.f32.partialorder %v587, 0.0
        %vm610 = vcmp.gt.f32.partialorder %v607, 0.0
        %v611 = vmul.f32 %v587, 0.6
        %v612 = vmul.f32 %v607, 0.6
        %v613 = vsel %vm609, %v587, %v611
        %v614 = vsel %vm610, %v607, %v612
        %v615 = vadd.f32 %v613, %v256
        %v616 = vadd.f32 %v614, %v257
        %617 = vst [vmem:[%s242] sm:$0xff] %v615
        %618 = vst [vmem:[%s242 + $0x8] sm:$0xff] %v616
        %s619 = sand.u32 %s140, 1
        %s620 = scalar_lea.sflag [#allocation5], %s619
        %s621 = sand.u32 %s140, 1
        %s622 = smul.addr %s621, 16
        %s623 = scalar_lea.vmem [#allocation6], %s622
        // Predicated region
        $region45: #{tpu_custom_call.1} parent=39 // pred_check
          %p624 = pneg %p150
        $region46: #{tpu_custom_call.1} parent=39 // pred_check_branch
          %626 = sbr.rel (%p624) target = $region48
        $region47: #{tpu_custom_call.1} parent=39 // pred_region
          %628 = vsyncadd %s620, 0
          %s629 = smul.addr %s22, 2
          %s630 = smul.addr %s629, 8
          %s631 = scalar_lea.hbm %s5, %s630
          %s633 = sshll.u32 %s623, 4
          %s634 = int_to_ptr.vmem [resolvable:$true] %s633
          %s635 = sshll.u32 %s631, 4
          %s636 = int_to_ptr.hbm [resolvable:$true] %s635
          %638 = dma.vmem_to_hbm [thread:$0]  %s634, 256, %s636, %s620
        $region48: #{tpu_custom_call.1} parent=39 // pred_fallthru
          _
      $region40: #{tpu_custom_call.1} parent=5 // pred_fallthru
        _
      %p639 = scmp.le.s32.totalorder 2, %s17
      // Predicated region
      $region49: #{tpu_custom_call.1} parent=5 // pred_check
        %p640 = pneg %p639
      $region50: #{tpu_custom_call.1} parent=5 // pred_check_branch
        %642 = sbr.rel (%p640) target = $region52
      $region51: #{tpu_custom_call.1} parent=5 // pred_region
        %s643 = ssub.s32 %s17, 2
        // Predicated region
        $region53: #{tpu_custom_call.1} parent=51 // pred_check
          %p644 = pneg %p156
        $region54: #{tpu_custom_call.1} parent=51 // pred_check_branch
          %646 = sbr.rel (%p644) target = $region56
        $region55: #{tpu_custom_call.1} parent=51 // pred_region
          %s647 = sand.u32 %s141, 1
          %s648 = scalar_lea.sflag [#allocation5], %s647
          %s649 = sand.u32 %s141, 1
          %s650 = smul.addr %s649, 16
          %s651 = scalar_lea.vmem [#allocation6], %s650
          %653 = dma.done %s648, 256
        $region56: #{tpu_custom_call.1} parent=51 // pred_fallthru
          _
      $region52: #{tpu_custom_call.1} parent=5 // pred_fallthru
        _
    $region6: #{tpu_custom_call.1} parent=1 // loop_footer
      %s21 = sadd.s32 1, %s17
    $region7: #{tpu_custom_call.1} parent=1 // loop_footer_branch
      %16 = sbr.rel target = $region3
    $region8: #{tpu_custom_call.1} parent=1 // loop_exit
      _
    %654 = vsyncpa [#allocation4], 1
    %s655 = scalar_lea.sflag [#allocation4], 1
    %656 = vsyncpa %s655, 1
    %657 = vsyncpa [#allocation5], 1
    %s658 = scalar_lea.sflag [#allocation5], 1
    %659 = vsyncpa %s658, 1

</llo_original>
